<compile_context>
chip_gen: v6e
topology: v6e:2x2x1
jax: 0.10.0
libtpu: 0.0.40
codegen_flags: <defaults>
</compile_context>

<pallas_src>
import jax
import jax.numpy as jnp
from jax.experimental import pallas as pl
from jax.experimental.pallas import tpu as pltpu

_LANE = 128
_SUBLANE = 8
# Whole-problem-resident threshold for the grid-less fast path (bytes). Kept
# well under v5e's 16 MiB default scoped VMEM so the same code is safe on all
# generations.
_SMALL_VMEM_BYTES = 8 * 1024 * 1024


# --------------------------------------------------------------------------
# One-time parameter transform (call at init, NOT on the per-call hot path).
# --------------------------------------------------------------------------
def prepare_linear_params(weight, bias, *, compute_dtype=None):
    """weight: [D_out, D_in] (torch layout), bias: [D_out].

    Returns (w_t, b2) with w_t: [D_in, D_out], b2: [1, D_out]. Pre-transposing
    puts K = D_in on the RHS sublanes so the kernel issues a plain MXU matmul
    with no per-call relayout of the weight tile.
    """
    w_t = jnp.asarray(weight).T
    b2 = jnp.asarray(bias).reshape(1, -1)
    if compute_dtype is not None:
        w_t = w_t.astype(compute_dtype)
    return w_t, b2


# --------------------------------------------------------------------------
# Kernels
# --------------------------------------------------------------------------
def _linear_small_kernel(x_ref, w_ref, b_ref, o_ref):
    # Whole problem VMEM-resident; single MXU matmul with f32 accumulation.
    acc = jnp.dot(x_ref[...], w_ref[...], preferred_element_type=jnp.float32)
    o_ref[...] = (acc + b_ref[...].astype(jnp.float32)).astype(o_ref.dtype)


def _linear_tiled_kernel(x_ref, w_ref, b_ref, o_ref, acc_ref):
    k = pl.program_id(2)

    @pl.when(k == 0)
    def _():
        acc_ref[...] = jnp.zeros_like(acc_ref)

    acc_ref[...] += jnp.dot(x_ref[...], w_ref[...],
                            preferred_element_type=jnp.float32)

    @pl.when(k == pl.num_programs(2) - 1)
    def _():
        o_ref[...] = (acc_ref[...]
                      + b_ref[...].astype(jnp.float32)).astype(o_ref.dtype)


def _pick_tile(dim, target, align):
    """Largest tile <= target that divides `dim` and is a multiple of `align`;
    falls back to the full dim (always legal for BlockSpec)."""
    if dim <= target:
        return dim
    t = (target // align) * align
    while t >= align:
        if dim % t == 0:
            return t
        t -= align
    return dim


# --------------------------------------------------------------------------
# Forward
# --------------------------------------------------------------------------
def logistic_regression_forward(x, w_t, b2, *, out_dtype=jnp.float32,
                                compute_dtype=None):
    """x: [B, D_in]; w_t: [D_in, D_out] (pre-transposed); b2: [1, D_out]."""
    if compute_dtype is not None:
        x = x.astype(compute_dtype)
    B, D_in = x.shape
    D_out = w_t.shape[1]

    itemsize = jnp.dtype(x.dtype).itemsize
    in_bytes = (x.size + w_t.size + b2.size) * itemsize
    out_bytes = B * D_out * jnp.dtype(out_dtype).itemsize
    cost = pl.CostEstimate(flops=2 * B * D_in * D_out,
                           transcendentals=0,
                           bytes_accessed=in_bytes + out_bytes)

    if in_bytes + out_bytes <= _SMALL_VMEM_BYTES:
        # Grid-less path: no pipeline machinery for a single resident tile.
        return pl.pallas_call(
            _linear_small_kernel,
            out_shape=jax.ShapeDtypeStruct((B, D_out), out_dtype),
            in_specs=[
                pl.BlockSpec(memory_space=pltpu.MemorySpace.VMEM),
                pl.BlockSpec(memory_space=pltpu.MemorySpace.VMEM),
                pl.BlockSpec(memory_space=pltpu.MemorySpace.VMEM),
            ],
            out_specs=pl.BlockSpec(memory_space=pltpu.MemorySpace.VMEM),
            cost_estimate=cost,
        )(x, w_t, b2)

    # Tiled, auto-pipelined path for non-toy sizes.
    # Targets: 256-multiple N/K tiles (v6e/v7x MXU is 2x256^2); sized so the
    # double-buffered working set stays far below v7x's 64 MiB VMEM.
    tm = _pick_tile(B, 256, _SUBLANE)
    tk = _pick_tile(D_in, 512, _LANE)
    tn = _pick_tile(D_out, 512, _LANE)

    grid = (pl.cdiv(B, tm), pl.cdiv(D_out, tn), pl.cdiv(D_in, tk))
    return pl.pallas_call(
        _linear_tiled_kernel,
        out_shape=jax.ShapeDtypeStruct((B, D_out), out_dtype),
        grid_spec=pltpu.PrefetchScalarGridSpec(
            num_scalar_prefetch=0,
            grid=grid,
            in_specs=[
                pl.BlockSpec((tm, tk), lambda i, j, k: (i, k)),
                pl.BlockSpec((tk, tn), lambda i, j, k: (k, j)),
                pl.BlockSpec((1, tn), lambda i, j, k: (0, j)),
            ],
            out_specs=pl.BlockSpec((tm, tn), lambda i, j, k: (i, j)),
            scratch_shapes=[pltpu.VMEM((tm, tn), jnp.float32)],
        ),
        compiler_params=pltpu.CompilerParams(
            dimension_semantics=("parallel", "parallel", "arbitrary"),
            vmem_limit_bytes=48 * 1024 * 1024,
        ),
        cost_estimate=cost,
    )(x, w_t, b2)


if __name__ == "__main__":
    # Small shapes implied by nn.Linear(input_dim, output_dim)
    batch, input_dim, output_dim = 8, 32, 16

    key = jax.random.PRNGKey(0)
    kx, kw, kb = jax.random.split(key, 3)

    x = jax.random.normal(kx, (batch, input_dim), dtype=jnp.float32)
    # Deterministic parameter init (mimics torch.nn.Linear uniform init range)
    bound = 1.0 / (input_dim ** 0.5)
    weight = jax.random.uniform(
        kw, (output_dim, input_dim), minval=-bound, maxval=bound,
        dtype=jnp.float32)
    bias = jax.random.uniform(
        kb, (output_dim,), minval=-bound, maxval=bound, dtype=jnp.float32)

    # One-time parameter transform (outside the per-call hot path).
    w_t, b2 = prepare_linear_params(weight, bias)

    out = logistic_regression_forward(x, w_t, b2)
    out = jax.block_until_ready(out)

    # Reference check against plain JAX (linear only, matching the torch forward)
    ref = x @ weight.T + bias
    assert out.shape == (batch, output_dim)
    assert out.dtype == jnp.float32
    assert jnp.allclose(out, ref, atol=1e-5, rtol=1e-5)

    print("KERNEL_OK")
</pallas_src>

<mosaic_0001>
module attributes {stable_mosaic.version = 11 : i64} {
  func.func @_linear_small_kernel(%arg0: memref<8x32xf32, #tpu.memory_space<vmem>>, %arg1: memref<32x16xf32, #tpu.memory_space<vmem>>, %arg2: memref<1x16xf32, #tpu.memory_space<vmem>>, %arg3: memref<8x16xf32, #tpu.memory_space<vmem>>) attributes {dimension_semantics = [], scalar_prefetch = 0 : i64, scratch_operands = 0 : i64, tpu.core_type = #tpu.core_type<tc>} {
    %c0 = arith.constant 0 : index
    %c0_0 = arith.constant 0 : index
    %0 = vector.load %arg0[%c0, %c0_0] : memref<8x32xf32, #tpu.memory_space<vmem>>, vector<8x32xf32>
    %c0_1 = arith.constant 0 : index
    %c0_2 = arith.constant 0 : index
    %1 = vector.load %arg1[%c0_1, %c0_2] : memref<32x16xf32, #tpu.memory_space<vmem>>, vector<32x16xf32>
    %cst = arith.constant dense<0.000000e+00> : vector<8x16xf32>
    %2 = tpu.matmul %0, %1, %cst {dimension_numbers = #tpu.dot_dimension_numbers<[1], [0], [0], [1], [0, 0, 1, 1], [], []>} : vector<8x32xf32>, vector<32x16xf32>, vector<8x16xf32> -> vector<8x16xf32>
    %c0_3 = arith.constant 0 : index
    %c0_4 = arith.constant 0 : index
    %3 = vector.load %arg2[%c0_3, %c0_4] : memref<1x16xf32, #tpu.memory_space<vmem>>, vector<1x16xf32>
    %4 = vector.broadcast %3 : vector<1x16xf32> to vector<8x16xf32>
    %5 = arith.addf %2, %4 : vector<8x16xf32>
    %c0_5 = arith.constant 0 : index
    %c0_6 = arith.constant 0 : index
    %6 = vector.load %arg3[%c0_5, %c0_6] : memref<8x16xf32, #tpu.memory_space<vmem>>, vector<8x16xf32>
    tpu.vector_store %arg3[%c0_5, %c0_6], %5 {strides = array<i32>} : memref<8x16xf32, #tpu.memory_space<vmem>>, vector<8x16xf32>,
    return
  }
}

</mosaic_0001>

<llo_original>
// kernel: tpu_custom_call.1
$region0: #{tpu_custom_call.1}
  #allocation0 [shape = 'u32[]', space=smem, size = 0x4, offset = 0x4, fixed_abs, tag = 'smem constant byte address 0x4 - core index']
  #allocation1 [shape = 'u32[144,128]{1,0:T(1,128)}', space=vmem, size = 0x12000, scoped, tag = 'internal scratch']
  %s0 = inlined_call_operand.vmem [shape: f32[8,32], index: 0, kind: input, shape index: {}]
  %s1 = inlined_call_operand.vmem [shape: f32[32,16], index: 1, kind: input, shape index: {}]
  %s2 = inlined_call_operand.vmem [shape: f32[1,16], index: 2, kind: input, shape index: {}]
  %s3 = inlined_call_operand.hbm [shape: f32[8,16], index: 3, kind: output, shape index: {}]
  %s4 = sld [smem:[#allocation0]]
  $region22: #{tpu_custom_call.1} parent=0
    _
  %s6 = ssub.s32 1, %s4
  %s7 = scalar_select 0, %s6, %s4
  $region1: #{tpu_custom_call.1} parent=0
    #allocation2 [shape = 'u8[4096]{0}', space=vmem, size = 0x1000, scoped, tag = 'output window, operand 0, single buffered']
    #allocation3 [shape = 's32[1]{0}', space=sflag, size = 0x4, scoped, tag = 'scoped memory for tpu_custom_call.1']
    %8 = vsyncpa [#allocation3], 0
    // Predicated region
    $region2: #{tpu_custom_call.1} parent=1 // pred_check
      _
    $region3: #{tpu_custom_call.1} parent=1 // pred_check_branch
      %10 = sbr.rel (0) target = $region5
    $region4: #{tpu_custom_call.1} parent=1 // pred_region
      _
    $region5: #{tpu_custom_call.1} parent=1 // pred_fallthru
      _
    // Predicated region
    $region6: #{tpu_custom_call.1} parent=1 // pred_check
      _
    $region7: #{tpu_custom_call.1} parent=1 // pred_check_branch
      %12 = sbr.rel (0) target = $region9
    $region8: #{tpu_custom_call.1} parent=1 // pred_region
      _
    $region9: #{tpu_custom_call.1} parent=1 // pred_fallthru
      _
    // Predicated region
    $region10: #{tpu_custom_call.1} parent=1 // pred_check
      _
    $region11: #{tpu_custom_call.1} parent=1 // pred_check_branch
      %14 = sbr.rel (0) target = $region13
    $region12: #{tpu_custom_call.1} parent=1 // pred_region
      _
    $region13: #{tpu_custom_call.1} parent=1 // pred_fallthru
      _
    %v15 = vld [vmem:[%s0] sm:$0xff]
    %v16 = vld [vmem:[%s1] sm:$0xff]
    %v17 = vld [vmem:[%s1 + $0x8] sm:$0xff]
    %v18 = vld [vmem:[%s1 + $0x10] sm:$0xff]
    %v19 = vld [vmem:[%s1 + $0x18] sm:$0xff]
    %v20 = vld [vmem:[%s2] sm:$0x1]
    %v22 = vlaneseq
    %v23 = vshrl.u32 %v22, 7
    %v24 = vsub.s32 0, %v23
    %v25 = vrot.slane %v20, %v24
    %vm27 = vcmask 261120
    %v29 = vsel %vm27, %v15, 0
    %31 = vmatprep.subr.mxu0 0.0
    %32 = vmatpush1.msra.mxu0 0.0
    %33 = vmatprep.subr.mxu0 0.0
    %34 = vmatpush1.msra.mxu0 0.0
    %35 = vmatprep.subr.mxu0 0.0
    %36 = vmatpush1.msra.mxu0 0.0
    %37 = vmatprep.subr.mxu0 0.0
    %38 = vmatpush1.msra.mxu0 0.0
    %39 = vmatprep.subr.mxu0 0.0
    %40 = vmatpush1.msra.mxu0 0.0
    %41 = vmatprep.subr.mxu0 0.0
    %42 = vmatpush1.msra.mxu0 0.0
    %43 = vmatprep.subr.mxu0 0.0
    %44 = vmatpush1.msra.mxu0 0.0
    %45 = vmatprep.subr.mxu0 0.0
    %46 = vmatpush1.msra.mxu0 0.0
    %47 = vmatprep.subr.mxu0 0.0
    %48 = vmatpush1.msra.mxu0 0.0
    %49 = vmatprep.subr.mxu0 0.0
    %50 = vmatpush1.msra.mxu0 0.0
    %51 = vmatprep.subr.mxu0 0.0
    %52 = vmatpush1.msra.mxu0 0.0
    %53 = vmatprep.subr.mxu0 0.0
    %54 = vmatpush1.msra.mxu0 0.0
    %55 = vmatprep.subr.mxu0 0.0
    %56 = vmatpush1.msra.mxu0 %v19
    %57 = vmatprep.subr.mxu0 0.0
    %58 = vmatpush1.msra.mxu0 %v18
    %59 = vmatprep.subr.mxu0 0.0
    %60 = vmatpush1.msra.mxu0 %v17
    %61 = vmatprep.subr.mxu0 0.0
    %62 = vmatpush1.msra.mxu0 %v16
    %63 = vmatprep.subr.mxu0 0.0
    %64 = vmatpush2.msra.mxu0 0.0
    %65 = vmatprep.subr.mxu0 0.0
    %66 = vmatpush2.msra.mxu0 0.0
    %67 = vmatprep.subr.mxu0 0.0
    %68 = vmatpush2.msra.mxu0 0.0
    %69 = vmatprep.subr.mxu0 0.0
    %70 = vmatpush2.msra.mxu0 0.0
    %71 = vmatprep.subr.mxu0 0.0
    %72 = vmatpush2.msra.mxu0 0.0
    %73 = vmatprep.subr.mxu0 0.0
    %74 = vmatpush2.msra.mxu0 0.0
    %75 = vmatprep.subr.mxu0 0.0
    %76 = vmatpush2.msra.mxu0 0.0
    %77 = vmatprep.subr.mxu0 0.0
    %78 = vmatpush2.msra.mxu0 0.0
    %79 = vmatprep.subr.mxu0 0.0
    %80 = vmatpush2.msra.mxu0 0.0
    %81 = vmatprep.subr.mxu0 0.0
    %82 = vmatpush2.msra.mxu0 0.0
    %83 = vmatprep.subr.mxu0 0.0
    %84 = vmatpush2.msra.mxu0 0.0
    %85 = vmatprep.subr.mxu0 0.0
    %86 = vmatpush2.msra.mxu0 0.0
    %87 = vmatprep.subr.mxu0 0.0
    %88 = vmatpush2.msra.mxu0 0.0
    %89 = vmatprep.subr.mxu0 0.0
    %90 = vmatpush2.msra.mxu0 0.0
    %91 = vmatprep.subr.mxu0 0.0
    %92 = vmatpush2.msra.mxu0 0.0
    %93 = vmatprep.subr.mxu0 0.0
    %94 = vmatpush2.msra.mxu0 0.0
    %95 = vmatprep.mubr.f32.mxu0 0.0
    %96 = vmatmul.mubr.f32.gmra.mxu0 %v29
    %v97 = vpop.f32.mrf.mxu0
    %v98 = vadd.f32 %v25, %v97
    %v99 = vpop.f32.mrf.mxu0
    %100 = vdwg.mxu0
    %vm101 = vcmask 130048
    %102 = vst.msk [vmem:[#allocation2] sm:$0xff] %vm101, %v98
    // Predicated region
    $region14: #{tpu_custom_call.1} parent=1 // pred_check
      _
    $region15: #{tpu_custom_call.1} parent=1 // pred_check_branch
      %104 = sbr.rel (0) target = $region17
    $region16: #{tpu_custom_call.1} parent=1 // pred_region
      %s106 = ssub.s32 128, 128
      %107 = vsyncadd [#allocation3], %s106
      %s109 = sshll.u32 [#allocation2], 4
      %s110 = int_to_ptr.vmem [resolvable:$true] %s109
      %112 = dma.vmem_to_hbm [thread:$0]  %s110, 128, %s3, [#allocation3]
    $region17: #{tpu_custom_call.1} parent=1 // pred_fallthru
      _
    // Predicated region
    $region18: #{tpu_custom_call.1} parent=1 // pred_check
      _
    $region19: #{tpu_custom_call.1} parent=1 // pred_check_branch
      %114 = sbr.rel (0) target = $region21
    $region20: #{tpu_custom_call.1} parent=1 // pred_region
      %115 = dma.done [#allocation3], 128
    $region21: #{tpu_custom_call.1} parent=1 // pred_fallthru
      _
    %116 = vsyncpa [#allocation3], 1

</llo_original>
